<compile_context>
chip_gen: v7x
topology: tpu7x:2x2x1
jax: 0.10.0
libtpu: 0.0.40
codegen_flags: <defaults>
</compile_context>

<pallas_src>
import functools
import math

import jax
import jax.numpy as jnp
import numpy as np
from jax import lax
from jax.experimental import pallas as pl
from jax.experimental.pallas import tpu as pltpu

NEG_INF = -9e15


def gat_kernel(h_ref, adj_ref, w_ref, a_ref, b_ref, out_ref, e_ref,
               *, leaky_slope, use_bias):
    h = h_ref[0]          # (N, D) float32
    adj = adj_ref[0]      # (N, N) int32
    w = w_ref[...]        # (D, D)
    a = a_ref[...]        # (1, D)  lane-dense row of a_params

    # h' = hidden @ W   (single MXU dot)
    hp = jnp.dot(h, w, preferred_element_type=jnp.float32)          # (N, D)
    if use_bias:
        hp = hp + b_ref[...]

    # e[i, j] = leakyrelu( sum_d hp[i,d] * a[d] * hp[j,d] )
    # dot_general contracts the last axis of BOTH operands -> no transpose.
    raw = lax.dot_general(hp * a, hp, (((1,), (1,)), ((), ())),
                          preferred_element_type=jnp.float32)       # (N, N)
    e = jnp.where(raw >= 0, raw, leaky_slope * raw)

    # adj = clamp(adj, max=1); mask = (adj == 1)
    neigh = jnp.minimum(adj, 1) == 1
    alpha = jnp.where(neigh, e, jnp.float32(NEG_INF))

    # row softmax (f32, numerically stable)
    m = jnp.max(alpha, axis=-1, keepdims=True)
    ex = jnp.exp(alpha - m)
    attn = ex / jnp.sum(ex, axis=-1, keepdims=True)

    out_ref[0] = jnp.dot(attn, hp, preferred_element_type=jnp.float32)
    e_ref[0] = e


def gat_layer(hidden, adj, W, a_params, b=None, *, alpha=0.2, bias=False):
    """Pallas forward of GATLayer. Returns (output [B,N,D], e [B,N,N])."""
    B, N, D = hidden.shape
    a_row = a_params.reshape(1, D).astype(jnp.float32)   # (D,1) -> lane-dense (1,D)
    if b is None:
        b = jnp.zeros((D,), jnp.float32)
    b_row = b.reshape(1, D).astype(jnp.float32)
    adj_i = adj.astype(jnp.int32)                         # exact integer compares

    kernel = functools.partial(gat_kernel, leaky_slope=float(alpha), use_bias=bias)

    grid_spec = pltpu.PrefetchScalarGridSpec(
        num_scalar_prefetch=0,
        grid=(B,),
        in_specs=[
            pl.BlockSpec((1, N, D), lambda bi: (bi, 0, 0)),   # hidden
            pl.BlockSpec((1, N, N), lambda bi: (bi, 0, 0)),   # adj (int32)
            pl.BlockSpec((D, D), lambda bi: (0, 0)),          # W
            pl.BlockSpec((1, D), lambda bi: (0, 0)),          # a_params (row)
            pl.BlockSpec((1, D), lambda bi: (0, 0)),          # bias row
        ],
        out_specs=[
            pl.BlockSpec((1, N, D), lambda bi: (bi, 0, 0)),   # output
            pl.BlockSpec((1, N, N), lambda bi: (bi, 0, 0)),   # e (pre-mask scores)
        ],
    )

    # Explicit VMEM budget: double-buffered in/out blocks + weights + headroom
    # for the in-kernel (N,N)/(N,D) intermediates.  Capped at 64 MiB (v7x).
    per_step = 4 * (2 * 2 * (N * D + N * N)      # in blocks, double-buffered
                    + 2 * 2 * (N * D + N * N)    # out blocks, double-buffered
                    + D * D + 2 * D              # weights
                    + 8 * N * N + 4 * N * D)     # intermediates headroom
    vmem_limit = int(min(64 << 20, max(32 << 20, 2 * per_step)))

    out, e = pl.pallas_call(
        kernel,
        out_shape=(jax.ShapeDtypeStruct((B, N, D), jnp.float32),
                   jax.ShapeDtypeStruct((B, N, N), jnp.float32)),
        grid_spec=grid_spec,
        compiler_params=pltpu.CompilerParams(
            dimension_semantics=("parallel",),
            vmem_limit_bytes=vmem_limit),
    )(hidden.astype(jnp.float32), adj_i, W.astype(jnp.float32), a_row, b_row)
    return out, e


# ---------------- pure-JAX reference (same math, no Pallas) ----------------
def reference(hidden, adj, W, a_params, b=None, alpha=0.2, bias=False):
    adj_c = jnp.minimum(adj.astype(jnp.int32), 1)
    hp = jnp.einsum("bnd,de->bne", hidden, W)
    if bias:
        hp = hp + b
    a = a_params.reshape(-1)
    raw = jnp.einsum("bid,bjd->bij", hp * a[None, None, :], hp)
    e = jnp.where(raw >= 0, raw, alpha * raw)
    scores = jnp.where(adj_c == 1, e, jnp.float32(NEG_INF))
    attn = jax.nn.softmax(scores, axis=-1)
    out = jnp.einsum("bij,bjd->bid", attn, hp)
    return out, e


def make_params(key, dim):
    stdv = 1.0 / math.sqrt(dim)
    kw, ka, kb = jax.random.split(key, 3)
    W = jax.random.uniform(kw, (dim, dim), jnp.float32, -stdv, stdv)
    a_params = jax.random.uniform(ka, (dim, 1), jnp.float32, -stdv, stdv)
    b = jax.random.uniform(kb, (dim,), jnp.float32, -stdv, stdv)
    return W, a_params, b


if __name__ == "__main__":
    B, N, D = 2, 8, 32
    key = jax.random.PRNGKey(0)
    k_h, k_adj, k_par = jax.random.split(key, 3)

    hidden = jax.random.normal(k_h, (B, N, D), jnp.float32)
    # edge weights 0..3: exercises the clamp(adj, max=1) path
    adj = jax.random.randint(k_adj, (B, N, N), 0, 4, jnp.int32)
    W, a_params, b = make_params(k_par, D)

    out, e = gat_layer(hidden, adj, W, a_params, b, alpha=0.2, bias=False)
    out = jax.block_until_ready(out)
    e = jax.block_until_ready(e)

    ref_out, ref_e = reference(hidden, adj, W, a_params, b, alpha=0.2, bias=False)
    ref_out = jax.block_until_ready(ref_out)
    ref_e = jax.block_until_ready(ref_e)

    np.testing.assert_allclose(np.asarray(out), np.asarray(ref_out), rtol=1e-4, atol=1e-4)
    np.testing.assert_allclose(np.asarray(e), np.asarray(ref_e), rtol=1e-4, atol=1e-4)

    print("KERNEL_OK")
</pallas_src>

<mosaic_0001>
module attributes {stable_mosaic.version = 11 : i64} {
  func.func @gat_kernel(%arg0: i32, %arg1: memref<1x8x32xf32, #tpu.memory_space<vmem>>, %arg2: memref<1x8x8xi32, #tpu.memory_space<vmem>>, %arg3: memref<32x32xf32, #tpu.memory_space<vmem>>, %arg4: memref<1x32xf32, #tpu.memory_space<vmem>>, %arg5: memref<1x32xf32, #tpu.memory_space<vmem>>, %arg6: memref<1x8x32xf32, #tpu.memory_space<vmem>>, %arg7: memref<1x8x8xf32, #tpu.memory_space<vmem>>) attributes {dimension_semantics = [#tpu.dimension_semantics<parallel>], iteration_bounds = array<i64: 2>, scalar_prefetch = 0 : i64, scratch_operands = 0 : i64, tpu.core_type = #tpu.core_type<tc>, window_params = [{transform_indices = @transform_0, window_bounds = array<i64: 1, 8, 32>}, {transform_indices = @transform_1, window_bounds = array<i64: 1, 8, 8>}, {pipeline_mode = #tpu.pipeline_mode<synchronous>, transform_indices = @transform_2, window_bounds = array<i64: 32, 32>}, {pipeline_mode = #tpu.pipeline_mode<synchronous>, transform_indices = @transform_3, window_bounds = array<i64: 1, 32>}, {pipeline_mode = #tpu.pipeline_mode<synchronous>, transform_indices = @transform_4, window_bounds = array<i64: 1, 32>}, {transform_indices = @transform_5, window_bounds = array<i64: 1, 8, 32>}, {transform_indices = @transform_6, window_bounds = array<i64: 1, 8, 8>}]} {
    %c0 = arith.constant 0 : index
    %c0_0 = arith.constant 0 : index
    %c0_1 = arith.constant 0 : index
    %0 = vector.load %arg1[%c0, %c0_0, %c0_1] : memref<1x8x32xf32, #tpu.memory_space<vmem>>, vector<1x8x32xf32>
    %1 = vector.shape_cast %0 : vector<1x8x32xf32> to vector<8x32xf32>
    %c0_2 = arith.constant 0 : index
    %c0_3 = arith.constant 0 : index
    %c0_4 = arith.constant 0 : index
    %2 = vector.load %arg2[%c0_2, %c0_3, %c0_4] : memref<1x8x8xi32, #tpu.memory_space<vmem>>, vector<1x8x8xi32>
    %3 = vector.shape_cast %2 : vector<1x8x8xi32> to vector<8x8xi32>
    %c0_5 = arith.constant 0 : index
    %c0_6 = arith.constant 0 : index
    %4 = vector.load %arg3[%c0_5, %c0_6] : memref<32x32xf32, #tpu.memory_space<vmem>>, vector<32x32xf32>
    %c0_7 = arith.constant 0 : index
    %c0_8 = arith.constant 0 : index
    %5 = vector.load %arg4[%c0_7, %c0_8] : memref<1x32xf32, #tpu.memory_space<vmem>>, vector<1x32xf32>
    %cst = arith.constant dense<0.000000e+00> : vector<8x32xf32>
    %6 = tpu.matmul %1, %4, %cst {dimension_numbers = #tpu.dot_dimension_numbers<[1], [0], [0], [1], [0, 0, 1, 1], [], []>} : vector<8x32xf32>, vector<32x32xf32>, vector<8x32xf32> -> vector<8x32xf32>
    %7 = vector.broadcast %5 : vector<1x32xf32> to vector<8x32xf32>
    %8 = arith.mulf %6, %7 : vector<8x32xf32>
    %cst_9 = arith.constant dense<0.000000e+00> : vector<8x8xf32>
    %9 = tpu.matmul %8, %6, %cst_9 {dimension_numbers = #tpu.dot_dimension_numbers<[1], [1], [0], [0], [0, 0, 1, 0], [], []>} : vector<8x32xf32>, vector<8x32xf32>, vector<8x8xf32> -> vector<8x8xf32>
    %cst_10 = arith.constant 0.000000e+00 : f32
    %10 = vector.broadcast %cst_10 : f32 to vector<8x8xf32>
    %11 = arith.cmpf oge, %9, %10 : vector<8x8xf32>
    %cst_11 = arith.constant 2.000000e-01 : f32
    %12 = vector.broadcast %cst_11 : f32 to vector<8x8xf32>
    %13 = arith.mulf %12, %9 : vector<8x8xf32>
    %14 = arith.select %11, %9, %13 : vector<8x8xi1>, vector<8x8xf32>
    %c1_i32 = arith.constant 1 : i32
    %15 = vector.broadcast %c1_i32 : i32 to vector<8x8xi32>
    %16 = arith.minsi %3, %15 : vector<8x8xi32>
    %c1_i32_12 = arith.constant 1 : i32
    %17 = vector.broadcast %c1_i32_12 : i32 to vector<8x8xi32>
    %18 = arith.cmpi eq, %16, %17 : vector<8x8xi32>
    %cst_13 = arith.constant -9.000000e+15 : f32
    %19 = vector.broadcast %cst_13 : f32 to vector<8x8xf32>
    %20 = arith.select %18, %14, %19 : vector<8x8xi1>, vector<8x8xf32>
    %cst_14 = arith.constant dense<0xFF800000> : vector<8xf32>
    %21 = vector.multi_reduction <maximumf>, %20, %cst_14 [1] : vector<8x8xf32> to vector<8xf32>
    %22 = vector.shape_cast %21 : vector<8xf32> to vector<8x1xf32>
    %23 = vector.broadcast %22 : vector<8x1xf32> to vector<8x8xf32>
    %24 = arith.subf %20, %23 : vector<8x8xf32>
    %25 = math.exp %24 : vector<8x8xf32>
    %cst_15 = arith.constant dense<0.000000e+00> : vector<8xf32>
    %26 = vector.multi_reduction <add>, %25, %cst_15 [1] : vector<8x8xf32> to vector<8xf32>
    %27 = vector.shape_cast %26 : vector<8xf32> to vector<8x1xf32>
    %28 = vector.broadcast %27 : vector<8x1xf32> to vector<8x8xf32>
    %29 = arith.divf %25, %28 : vector<8x8xf32>
    %cst_16 = arith.constant dense<0.000000e+00> : vector<8x32xf32>
    %30 = tpu.matmul %29, %6, %cst_16 {dimension_numbers = #tpu.dot_dimension_numbers<[1], [0], [0], [1], [0, 0, 1, 1], [], []>} : vector<8x8xf32>, vector<8x32xf32>, vector<8x32xf32> -> vector<8x32xf32>
    %c0_17 = arith.constant 0 : index
    %c0_18 = arith.constant 0 : index
    %c0_19 = arith.constant 0 : index
    %31 = vector.load %arg6[%c0_17, %c0_18, %c0_19] : memref<1x8x32xf32, #tpu.memory_space<vmem>>, vector<1x8x32xf32>
    %32 = vector.shape_cast %31 : vector<1x8x32xf32> to vector<8x32xf32>
    %33 = vector.shape_cast %30 : vector<8x32xf32> to vector<1x8x32xf32>
    tpu.vector_store %arg6[%c0_17, %c0_18, %c0_19], %33 {strides = array<i32>} : memref<1x8x32xf32, #tpu.memory_space<vmem>>, vector<1x8x32xf32>,
    %c0_20 = arith.constant 0 : index
    %c0_21 = arith.constant 0 : index
    %c0_22 = arith.constant 0 : index
    %34 = vector.load %arg7[%c0_20, %c0_21, %c0_22] : memref<1x8x8xf32, #tpu.memory_space<vmem>>, vector<1x8x8xf32>
    %35 = vector.shape_cast %34 : vector<1x8x8xf32> to vector<8x8xf32>
    %36 = vector.shape_cast %14 : vector<8x8xf32> to vector<1x8x8xf32>
    tpu.vector_store %arg7[%c0_20, %c0_21, %c0_22], %36 {strides = array<i32>} : memref<1x8x8xf32, #tpu.memory_space<vmem>>, vector<1x8x8xf32>,
    return
  }
  func.func @transform_0(%arg0: i32) -> (i32, i32, i32) {
    %c0_i32 = arith.constant 0 : i32
    %c0_i32_0 = arith.constant 0 : i32
    %c0_i32_1 = arith.constant 0 : i32
    return %arg0, %c0_i32, %c0_i32_0 : i32, i32, i32
  }
  func.func @transform_1(%arg0: i32) -> (i32, i32, i32) {
    %c0_i32 = arith.constant 0 : i32
    %c0_i32_0 = arith.constant 0 : i32
    %c0_i32_1 = arith.constant 0 : i32
    return %arg0, %c0_i32, %c0_i32_0 : i32, i32, i32
  }
  func.func @transform_2(%arg0: i32) -> (i32, i32) {
    %c0_i32 = arith.constant 0 : i32
    %c0_i32_0 = arith.constant 0 : i32
    %c0_i32_1 = arith.constant 0 : i32
    return %c0_i32, %c0_i32_0 : i32, i32
  }
  func.func @transform_3(%arg0: i32) -> (i32, i32) {
    %c0_i32 = arith.constant 0 : i32
    %c0_i32_0 = arith.constant 0 : i32
    %c0_i32_1 = arith.constant 0 : i32
    return %c0_i32, %c0_i32_0 : i32, i32
  }
  func.func @transform_4(%arg0: i32) -> (i32, i32) {
    %c0_i32 = arith.constant 0 : i32
    %c0_i32_0 = arith.constant 0 : i32
    %c0_i32_1 = arith.constant 0 : i32
    return %c0_i32, %c0_i32_0 : i32, i32
  }
  func.func @transform_5(%arg0: i32) -> (i32, i32, i32) {
    %c0_i32 = arith.constant 0 : i32
    %c0_i32_0 = arith.constant 0 : i32
    %c0_i32_1 = arith.constant 0 : i32
    return %arg0, %c0_i32, %c0_i32_0 : i32, i32, i32
  }
  func.func @transform_6(%arg0: i32) -> (i32, i32, i32) {
    %c0_i32 = arith.constant 0 : i32
    %c0_i32_0 = arith.constant 0 : i32
    %c0_i32_1 = arith.constant 0 : i32
    return %arg0, %c0_i32, %c0_i32_0 : i32, i32, i32
  }
}

</mosaic_0001>

<llo_original>
// kernel: tpu_custom_call.1
$region0: #{tpu_custom_call.1}
  #allocation0 [shape = 'u32[]', space=smem, size = 0x4, offset = 0x4, fixed_abs, tag = 'smem constant byte address 0x4 - core index']
  #allocation1 [shape = 'u32[144,128]{1,0:T(1,128)}', space=vmem, size = 0x12000, scoped, tag = 'internal scratch']
  %s0 = inlined_call_operand.hbm [shape: f32[2,8,32], index: 0, kind: input, shape index: {}]
  %s1 = inlined_call_operand.hbm [shape: s32[2,8,8], index: 1, kind: input, shape index: {}]
  %s2 = inlined_call_operand.hbm [shape: f32[32,32], index: 2, kind: input, shape index: {}]
  %s3 = inlined_call_operand.vmem [shape: f32[1,32], index: 3, kind: input, shape index: {}]
  %s4 = inlined_call_operand.vmem [shape: f32[1,32], index: 4, kind: input, shape index: {}]
  %s5 = inlined_call_operand.hbm [shape: f32[2,8,32], index: 5, kind: output, shape index: {0}]
  %s6 = inlined_call_operand.hbm [shape: f32[2,8,8], index: 6, kind: output, shape index: {1}]
  %7 = xla_tuple %s5, %s6
  %s8 = sld [smem:[#allocation0]]
  $region73: #{tpu_custom_call.1} parent=0
    _
  %s10 = ssub.s32 1, %s8
  %s11 = scalar_select 0, %s10, %s8
  $region1: #{tpu_custom_call.1} parent=0
    #allocation2 [shape = 'u8[8192]{0}', space=vmem, size = 0x2000, scoped, tag = 'input window, operand 0']
    #allocation3 [shape = 's32[2]{0}', space=sflag, size = 0x8, scoped, tag = 'scoped memory for tpu_custom_call.1']
    #allocation4 [shape = 's32[2]{0}', space=sflag, size = 0x8, scoped, tag = 'scoped memory for tpu_custom_call.1']
    #allocation5 [shape = 'u8[8192]{0}', space=vmem, size = 0x2000, scoped, tag = 'input window, operand 1']
    #allocation6 [shape = 's32[2]{0}', space=sflag, size = 0x8, scoped, tag = 'scoped memory for tpu_custom_call.1']
    #allocation7 [shape = 'u8[16384]{0}', space=vmem, size = 0x4000, scoped, tag = 'input window, operand 2, single buffered']
    #allocation8 [shape = 'u8[8192]{0}', space=vmem, size = 0x2000, scoped, tag = 'output window, operand 0']
    #allocation9 [shape = 'u8[8192]{0}', space=vmem, size = 0x2000, scoped, tag = 'output window, operand 1']
    #allocation10 [shape = 's32[2]{0}', space=sflag, size = 0x8, scoped, tag = 'scoped memory for tpu_custom_call.1']
    %12 = vsyncpa [#allocation3], 0
    %s13 = scalar_lea.sflag [#allocation3], 1
    %14 = vsyncpa %s13, 0
    %15 = vsyncpa [#allocation6], 0
    %s16 = scalar_lea.sflag [#allocation6], 1
    %17 = vsyncpa %s16, 0
    %18 = vsyncpa [#allocation4], 0
    %s19 = scalar_lea.sflag [#allocation4], 1
    %20 = vsyncpa %s19, 0
    %21 = vsyncpa [#allocation10], 0
    %s22 = scalar_lea.sflag [#allocation10], 1
    %23 = vsyncpa %s22, 0
    loop: start=0, step=1, limit=4
    $region2: #{tpu_custom_call.1} parent=1 // loop_pre_header
      _
    $region3: #{tpu_custom_call.1} parent=1 // loop_header
      %s25 = sphi 0, %s29
      %p26 = scmp.ge.s32.totalorder %s25, 4
      %s35 = sphi 0, %s37
      %s38 = sphi 0, %s35
      %s39 = sphi 0, %s38
      %s55 = sphi 0, %s39
      %s61 = sphi 0, %s63
      %s64 = sphi 0, %s61
      %s65 = sphi 0, %s64
      %s81 = sphi 0, %s65
      %s85 = sphi 0, %s85
      %s87 = sphi 0, %s85
      %s88 = sphi 0, %s87
      %s102 = sphi 0, %s88
      %s106 = sphi 0, %s106
      %s108 = sphi 0, %s106
      %s109 = sphi 0, %s108
      %s123 = sphi 0, %s109
      %s127 = sphi 0, %s127
      %s129 = sphi 0, %s127
      %s130 = sphi 0, %s129
      %s144 = sphi 0, %s130
      %s150 = sphi 0, %s152
      %s153 = sphi 0, %s150
      %s154 = sphi 0, %s153
      %s170 = sphi 0, %s154
      %s176 = sphi 0, %s178
      %s179 = sphi 0, %s176
      %s180 = sphi 0, %s179
      %s196 = sphi 0, %s180
    $region4: #{tpu_custom_call.1} parent=1 // loop_header_branch
      %28 = sbr.rel (%p26) target = $region8
    $region5: #{tpu_custom_call.1} parent=1 // loop_body
      %s30 = ssub.s32 %s25, 1
      %s31 = ssub.s32 %s25, 2
      %s32 = sadd.s32 %s25, 1
      %s33 = ssub.s32 %s25, %s32
      %p34 = scmp.eq.s32.totalorder %s33, 0
      %s36 = sadd.s32 %s35, 1
      %s37 = scalar_select %p34, %s35, %s36
      %p40 = pneg %p34
      %p41 = scmp.eq.s32.totalorder %s25, 1
      %p42 = por %p40, %p41
      %p43 = scmp.ne.s32.totalorder %s35, %s38
      %p44 = scmp.eq.s32.totalorder %s25, 0
      %p45 = por %p43, %p44
      %p46 = scmp.ne.s32.totalorder %s35, %s38
      %p47 = scmp.eq.s32.totalorder %s30, 1
      %p48 = por %p46, %p47
      %p49 = scmp.ne.s32.totalorder %s38, %s39
      %p50 = scmp.eq.s32.totalorder %s30, 0
      %p51 = por %p49, %p50
      %p52 = scmp.ne.s32.totalorder %s38, %s39
      %p53 = scmp.eq.s32.totalorder %s31, 1
      %p54 = por %p52, %p53
      %p56 = scmp.ne.s32.totalorder %s39, %s55
      %p57 = scmp.eq.s32.totalorder %s31, 0
      %p58 = por %p56, %p57
      %s59 = ssub.s32 %s25, %s32
      %p60 = scmp.eq.s32.totalorder %s59, 0
      %s62 = sadd.s32 %s61, 1
      %s63 = scalar_select %p60, %s61, %s62
      %p66 = pneg %p60
      %p67 = scmp.eq.s32.totalorder %s25, 1
      %p68 = por %p66, %p67
      %p69 = scmp.ne.s32.totalorder %s61, %s64
      %p70 = scmp.eq.s32.totalorder %s25, 0
      %p71 = por %p69, %p70
      %p72 = scmp.ne.s32.totalorder %s61, %s64
      %p73 = scmp.eq.s32.totalorder %s30, 1
      %p74 = por %p72, %p73
      %p75 = scmp.ne.s32.totalorder %s64, %s65
      %p76 = scmp.eq.s32.totalorder %s30, 0
      %p77 = por %p75, %p76
      %p78 = scmp.ne.s32.totalorder %s64, %s65
      %p79 = scmp.eq.s32.totalorder %s31, 1
      %p80 = por %p78, %p79
      %p82 = scmp.ne.s32.totalorder %s65, %s81
      %p83 = scmp.eq.s32.totalorder %s31, 0
      %p84 = por %p82, %p83
      %s86 = sadd.s32 %s85, 1
      %p89 = scmp.eq.s32.totalorder %s25, 1
      %p90 = scmp.ne.s32.totalorder %s85, %s87
      %p91 = scmp.eq.s32.totalorder %s25, 0
      %p92 = por %p90, %p91
      %p93 = scmp.ne.s32.totalorder %s85, %s87
      %p94 = scmp.eq.s32.totalorder %s30, 1
      %p95 = por %p93, %p94
      %p96 = scmp.ne.s32.totalorder %s87, %s88
      %p97 = scmp.eq.s32.totalorder %s30, 0
      %p98 = por %p96, %p97
      %p99 = scmp.ne.s32.totalorder %s87, %s88
      %p100 = scmp.eq.s32.totalorder %s31, 1
      %p101 = por %p99, %p100
      %p103 = scmp.ne.s32.totalorder %s88, %s102
      %p104 = scmp.eq.s32.totalorder %s31, 0
      %p105 = por %p103, %p104
      %s107 = sadd.s32 %s106, 1
      %p110 = scmp.eq.s32.totalorder %s25, 1
      %p111 = scmp.ne.s32.totalorder %s106, %s108
      %p112 = scmp.eq.s32.totalorder %s25, 0
      %p113 = por %p111, %p112
      %p114 = scmp.ne.s32.totalorder %s106, %s108
      %p115 = scmp.eq.s32.totalorder %s30, 1
      %p116 = por %p114, %p115
      %p117 = scmp.ne.s32.totalorder %s108, %s109
      %p118 = scmp.eq.s32.totalorder %s30, 0
      %p119 = por %p117, %p118
      %p120 = scmp.ne.s32.totalorder %s108, %s109
      %p121 = scmp.eq.s32.totalorder %s31, 1
      %p122 = por %p120, %p121
      %p124 = scmp.ne.s32.totalorder %s109, %s123
      %p125 = scmp.eq.s32.totalorder %s31, 0
      %p126 = por %p124, %p125
      %s128 = sadd.s32 %s127, 1
      %p131 = scmp.eq.s32.totalorder %s25, 1
      %p132 = scmp.ne.s32.totalorder %s127, %s129
      %p133 = scmp.eq.s32.totalorder %s25, 0
      %p134 = por %p132, %p133
      %p135 = scmp.ne.s32.totalorder %s127, %s129
      %p136 = scmp.eq.s32.totalorder %s30, 1
      %p137 = por %p135, %p136
      %p138 = scmp.ne.s32.totalorder %s129, %s130
      %p139 = scmp.eq.s32.totalorder %s30, 0
      %p140 = por %p138, %p139
      %p141 = scmp.ne.s32.totalorder %s129, %s130
      %p142 = scmp.eq.s32.totalorder %s31, 1
      %p143 = por %p141, %p142
      %p145 = scmp.ne.s32.totalorder %s130, %s144
      %p146 = scmp.eq.s32.totalorder %s31, 0
      %p147 = por %p145, %p146
      %s148 = ssub.s32 %s25, %s32
      %p149 = scmp.eq.s32.totalorder %s148, 0
      %s151 = sadd.s32 %s150, 1
      %s152 = scalar_select %p149, %s150, %s151
      %p155 = pneg %p149
      %p156 = scmp.eq.s32.totalorder %s25, 1
      %p157 = por %p155, %p156
      %p158 = scmp.ne.s32.totalorder %s150, %s153
      %p159 = scmp.eq.s32.totalorder %s25, 0
      %p160 = por %p158, %p159
      %p161 = scmp.ne.s32.totalorder %s150, %s153
      %p162 = scmp.eq.s32.totalorder %s30, 1
      %p163 = por %p161, %p162
      %p164 = scmp.ne.s32.totalorder %s153, %s154
      %p165 = scmp.eq.s32.totalorder %s30, 0
      %p166 = por %p164, %p165
      %p167 = scmp.ne.s32.totalorder %s153, %s154
      %p168 = scmp.eq.s32.totalorder %s31, 1
      %p169 = por %p167, %p168
      %p171 = scmp.ne.s32.totalorder %s154, %s170
      %p172 = scmp.eq.s32.totalorder %s31, 0
      %p173 = por %p171, %p172
      %s174 = ssub.s32 %s25, %s32
      %p175 = scmp.eq.s32.totalorder %s174, 0
      %s177 = sadd.s32 %s176, 1
      %s178 = scalar_select %p175, %s176, %s177
      %p181 = pneg %p175
      %p182 = scmp.eq.s32.totalorder %s25, 1
      %p183 = por %p181, %p182
      %p184 = scmp.ne.s32.totalorder %s176, %s179
      %p185 = scmp.eq.s32.totalorder %s25, 0
      %p186 = por %p184, %p185
      %p187 = scmp.ne.s32.totalorder %s176, %s179
      %p188 = scmp.eq.s32.totalorder %s30, 1
      %p189 = por %p187, %p188
      %p190 = scmp.ne.s32.totalorder %s179, %s180
      %p191 = scmp.eq.s32.totalorder %s30, 0
      %p192 = por %p190, %p191
      %p193 = scmp.ne.s32.totalorder %s179, %s180
      %p194 = scmp.eq.s32.totalorder %s31, 1
      %p195 = por %p193, %p194
      %p197 = scmp.ne.s32.totalorder %s180, %s196
      %p198 = scmp.eq.s32.totalorder %s31, 0
      %p199 = por %p197, %p198
      %p200 = scmp.le.s32.totalorder 1, %s25
      %p201 = scmp.lt.s32.totalorder %s25, 3
      %p202 = pnand %p200, %p201
      %p203 = pneg %p202
      // Predicated region
      $region9: #{tpu_custom_call.1} parent=5 // pred_check
        _
      $region10: #{tpu_custom_call.1} parent=5 // pred_check_branch
        %205 = sbr.rel (%p202) target = $region12
      $region11: #{tpu_custom_call.1} parent=5 // pred_region
        %s206 = ssub.s32 %s25, 1
        // Predicated region
        $region13: #{tpu_custom_call.1} parent=11 // pred_check
          %p207 = pneg %p98
        $region14: #{tpu_custom_call.1} parent=11 // pred_check_branch
          %209 = sbr.rel (%p207) target = $region16
        $region15: #{tpu_custom_call.1} parent=11 // pred_region
          %s211 = ssub.s32 512, 512
          %212 = vsyncadd [#allocation6], %s211
          %s213 = sshll.u32 [#allocation7], 4
          %s214 = int_to_ptr.vmem [resolvable:$true] %s213
          %219 = dma.hbm_to_vmem [thread:$0]  %s2, 512, %s214, [#allocation6], 128, 128, 8
        $region16: #{tpu_custom_call.1} parent=11 // pred_fallthru
          _
        // Predicated region
        $region17: #{tpu_custom_call.1} parent=11 // pred_check
          %p220 = pneg %p119
        $region18: #{tpu_custom_call.1} parent=11 // pred_check_branch
          %222 = sbr.rel (%p220) target = $region20
        $region19: #{tpu_custom_call.1} parent=11 // pred_region
          _
        $region20: #{tpu_custom_call.1} parent=11 // pred_fallthru
          _
        // Predicated region
        $region21: #{tpu_custom_call.1} parent=11 // pred_check
          %p223 = pneg %p140
        $region22: #{tpu_custom_call.1} parent=11 // pred_check_branch
          %225 = sbr.rel (%p223) target = $region24
        $region23: #{tpu_custom_call.1} parent=11 // pred_region
          _
        $region24: #{tpu_custom_call.1} parent=11 // pred_fallthru
          _
      $region12: #{tpu_custom_call.1} parent=5 // pred_fallthru
        _
      %p226 = scmp.lt.s32.totalorder %s25, 2
      // Predicated region
      $region25: #{tpu_custom_call.1} parent=5 // pred_check
        %p227 = pneg %p226
      $region26: #{tpu_custom_call.1} parent=5 // pred_check_branch
        %229 = sbr.rel (%p227) target = $region28
      $region27: #{tpu_custom_call.1} parent=5 // pred_region
        // Predicated region
        $region29: #{tpu_custom_call.1} parent=27 // pred_check
          %p230 = pneg %p45
        $region30: #{tpu_custom_call.1} parent=27 // pred_check_branch
          %232 = sbr.rel (%p230) target = $region32
        $region31: #{tpu_custom_call.1} parent=27 // pred_region
          %s233 = sand.u32 %s35, 1
          %s234 = scalar_lea.sflag [#allocation3], %s233
          %s235 = sand.u32 %s35, 1
          %s236 = smul.addr %s235, 8
          %s237 = scalar_lea.vmem [#allocation2], %s236
          %s239 = ssub.s32 128, 128
          %240 = vsyncadd %s234, %s239
          %s241 = smul.addr %s25, 128
          %s242 = scalar_lea.hbm %s0, %s241
          %s244 = sshll.u32 %s237, 4
          %s245 = int_to_ptr.vmem [resolvable:$true] %s244
          %247 = dma.hbm_to_vmem [thread:$0]  %s242, 128, %s245, %s234
        $region32: #{tpu_custom_call.1} parent=27 // pred_fallthru
          _
        // Predicated region
        $region33: #{tpu_custom_call.1} parent=27 // pred_check
          %p248 = pneg %p71
        $region34: #{tpu_custom_call.1} parent=27 // pred_check_branch
          %250 = sbr.rel (%p248) target = $region36
        $region35: #{tpu_custom_call.1} parent=27 // pred_region
          %s251 = sand.u32 %s25, 1
          %s252 = scalar_lea.sflag [#allocation6], %s251
          %s253 = sand.u32 %s61, 1
          %s254 = smul.addr %s253, 8
          %s255 = scalar_lea.vmem [#allocation5], %s254
          %s257 = ssub.s32 128, 128
          %258 = vsyncadd %s252, %s257
          %s259 = smul.addr %s25, 128
          %s260 = scalar_lea.hbm %s1, %s259
          %s262 = sshll.u32 %s255, 4
          %s263 = int_to_ptr.vmem [resolvable:$true] %s262
          %265 = dma.hbm_to_vmem [thread:$0]  %s260, 128, %s263, %s252
        $region36: #{tpu_custom_call.1} parent=27 // pred_fallthru
          _
      $region28: #{tpu_custom_call.1} parent=5 // pred_fallthru
        _
      %p266 = scmp.le.s32.totalorder 1, %s25
      %p267 = scmp.lt.s32.totalorder %s25, 3
      %p268 = pnand %p266, %p267
      %p269 = pneg %p268
      // Predicated region
      $region37: #{tpu_custom_call.1} parent=5 // pred_check
        _
      $region38: #{tpu_custom_call.1} parent=5 // pred_check_branch
        %271 = sbr.rel (%p268) target = $region40
      $region39: #{tpu_custom_call.1} parent=5 // pred_region
        %s272 = ssub.s32 %s25, 1
        %s273 = sand.u32 %s38, 1
        %s274 = scalar_lea.sflag [#allocation3], %s273
        %s275 = sand.u32 %s38, 1
        %s276 = smul.addr %s275, 8
        %s277 = scalar_lea.vmem [#allocation2], %s276
        // Predicated region
        $region41: #{tpu_custom_call.1} parent=39 // pred_check
          %p278 = pneg %p51
        $region42: #{tpu_custom_call.1} parent=39 // pred_check_branch
          %280 = sbr.rel (%p278) target = $region44
        $region43: #{tpu_custom_call.1} parent=39 // pred_region
          %281 = dma.done %s274, 128
        $region44: #{tpu_custom_call.1} parent=39 // pred_fallthru
          _
        %s282 = sand.u32 %s30, 1
        %s283 = scalar_lea.sflag [#allocation6], %s282
        %s284 = sand.u32 %s64, 1
        %s285 = smul.addr %s284, 8
        %s286 = scalar_lea.vmem [#allocation5], %s285
        // Predicated region
        $region45: #{tpu_custom_call.1} parent=39 // pred_check
          %p287 = pneg %p77
        $region46: #{tpu_custom_call.1} parent=39 // pred_check_branch
          %289 = sbr.rel (%p287) target = $region48
        $region47: #{tpu_custom_call.1} parent=39 // pred_region
          %290 = dma.done %s283, 128
        $region48: #{tpu_custom_call.1} parent=39 // pred_fallthru
          _
        // Predicated region
        $region49: #{tpu_custom_call.1} parent=39 // pred_check
          %p291 = pneg %p98
        $region50: #{tpu_custom_call.1} parent=39 // pred_check_branch
          %293 = sbr.rel (%p291) target = $region52
        $region51: #{tpu_custom_call.1} parent=39 // pred_region
          %294 = dma.done [#allocation6], 512
        $region52: #{tpu_custom_call.1} parent=39 // pred_fallthru
          _
        %s295 = sand.u32 %s38, 1
        %s296 = scalar_lea.sflag [#allocation3], %s295
        %s297 = sand.u32 %s38, 1
        %s298 = smul.addr %s297, 8
        %s299 = scalar_lea.vmem [#allocation2], %s298
        %p300 = pneg %p51
        %p301 = pneg %p48
        %s302 = sand.u32 %s30, 1
        %s303 = scalar_lea.sflag [#allocation6], %s302
        %s304 = sand.u32 %s64, 1
        %s305 = smul.addr %s304, 8
        %s306 = scalar_lea.vmem [#allocation5], %s305
        %p307 = pneg %p77
        %p308 = pneg %p74
        %p309 = pneg %p98
        %p310 = pneg %p95
        %p311 = pneg %p119
        %p312 = pneg %p116
        %p313 = pneg %p140
        %p314 = pneg %p137
        %p315 = pneg %p166
        %p316 = pneg %p163
        %s317 = sand.u32 %s153, 1
        %s318 = scalar_lea.sflag [#allocation4], %s317
        %s319 = sand.u32 %s153, 1
        %s320 = smul.addr %s319, 8
        %s321 = scalar_lea.vmem [#allocation8], %s320
        %p322 = pneg %p192
        %p323 = pneg %p189
        %s324 = sand.u32 %s179, 1
        %s325 = scalar_lea.sflag [#allocation10], %s324
        %s326 = sand.u32 %s179, 1
        %s327 = smul.addr %s326, 8
        %s328 = scalar_lea.vmem [#allocation9], %s327
        %v329 = vld [vmem:[%s277] sm:$0xff]
        %v330 = vld [vmem:[%s286] sm:$0xff]
        %v331 = vld [vmem:[#allocation7] sm:$0xff]
        %v332 = vld [vmem:[#allocation7 + $0x8] sm:$0xff]
        %v333 = vld [vmem:[#allocation7 + $0x10] sm:$0xff]
        %v334 = vld [vmem:[#allocation7 + $0x18] sm:$0xff]
        %v335 = vld [vmem:[%s3] sm:$0x1]
        %vm336 = vcmask 261120
        %v338 = vsel %vm336, %v329, 0
        %340 = vmatprep.subr.mxu0 0.0
        %341 = vmatpush1.msra.mxu0 %v331
        %342 = vmatprep.subr.mxu0 0.0
        %343 = vmatpush1.msra.mxu0 %v332
        %344 = vmatprep.subr.mxu0 0.0
        %345 = vmatpush1.msra.mxu0 %v333
        %346 = vmatprep.subr.mxu0 0.0
        %347 = vmatpush1.msra.mxu0 %v334
        %348 = vmatprep.subr.mxu0 0.0
        %349 = vmatpush1.msra.mxu0 0.0
        %350 = vmatprep.subr.mxu0 0.0
        %351 = vmatpush1.msra.mxu0 0.0
        %352 = vmatprep.subr.mxu0 0.0
        %353 = vmatpush1.msra.mxu0 0.0
        %354 = vmatprep.subr.mxu0 0.0
        %355 = vmatpush1.msra.mxu0 0.0
        %356 = vmatprep.subr.mxu0 0.0
        %357 = vmatpush1.msra.mxu0 0.0
        %358 = vmatprep.subr.mxu0 0.0
        %359 = vmatpush1.msra.mxu0 0.0
        %360 = vmatprep.subr.mxu0 0.0
        %361 = vmatpush1.msra.mxu0 0.0
        %362 = vmatprep.subr.mxu0 0.0
        %363 = vmatpush1.msra.mxu0 0.0
        %364 = vmatprep.subr.mxu0 0.0
        %365 = vmatpush1.msra.mxu0 0.0
        %366 = vmatprep.subr.mxu0 0.0
        %367 = vmatpush1.msra.mxu0 0.0
        %368 = vmatprep.subr.mxu0 0.0
        %369 = vmatpush1.msra.mxu0 0.0
        %370 = vmatprep.subr.mxu0 0.0
        %371 = vmatpush1.msra.mxu0 0.0
        %372 = vmatprep.subr.mxu0 0.0
        %373 = vmatpush1.msra.mxu0 0.0
        %374 = vmatprep.subr.mxu0 0.0
        %375 = vmatpush1.msra.mxu0 0.0
        %376 = vmatprep.subr.mxu0 0.0
        %377 = vmatpush1.msra.mxu0 0.0
        %378 = vmatprep.subr.mxu0 0.0
        %379 = vmatpush1.msra.mxu0 0.0
        %380 = vmatprep.subr.mxu0 0.0
        %381 = vmatpush1.msra.mxu0 0.0
        %382 = vmatprep.subr.mxu0 0.0
        %383 = vmatpush1.msra.mxu0 0.0
        %384 = vmatprep.subr.mxu0 0.0
        %385 = vmatpush1.msra.mxu0 0.0
        %386 = vmatprep.subr.mxu0 0.0
        %387 = vmatpush1.msra.mxu0 0.0
        %388 = vmatprep.subr.mxu0 0.0
        %389 = vmatpush1.msra.mxu0 0.0
        %390 = vmatprep.subr.mxu0 0.0
        %391 = vmatpush1.msra.mxu0 0.0
        %392 = vmatprep.subr.mxu0 0.0
        %393 = vmatpush1.msra.mxu0 0.0
        %394 = vmatprep.subr.mxu0 0.0
        %395 = vmatpush1.msra.mxu0 0.0
        %396 = vmatprep.subr.mxu0 0.0
        %397 = vmatpush1.msra.mxu0 0.0
        %398 = vmatprep.subr.mxu0 0.0
        %399 = vmatpush1.msra.mxu0 0.0
        %400 = vmatprep.subr.mxu0 0.0
        %401 = vmatpush1.msra.mxu0 0.0
        %402 = vmatprep.subr.mxu0 0.0
        %403 = vmatpush1.msra.mxu0 0.0
        %404 = vmatprep.mubr.f32.mxu0 0.0
        %405 = vmatmul.mubr.f32.gmra.mrb[0].mxu0 %v338
        %v406 = vpop.f32.mrb[0].mxu0
        %v407 = vadd.f32 0.0, %v406
        %v408 = vpop.f32.mrb[0].mxu0
        %409 = vdwg.mxu0
        %v411 = vlaneseq
        %v412 = vshrl.u32 %v411, 7
        %v413 = vsub.s32 0, %v412
        %v414 = vrot.slane %v335, %v413
        %v416 = vmul.f32 %v407, %v414
        %v418 = vsel %vm336, %v416, 0
        %v421 = vsel %vm336, %v407, 0
        %423 = vmatprep.subr.mxu0 0.0
        %424 = vmatpush1.xpose.msra.mxu0 %v421
        %425 = vmatprep.subr.mxu0 0.0
        %426 = vmatpush1.xpose.msra.mxu0 0.0
        %427 = vmatprep.subr.mxu0 0.0
        %428 = vmatpush1.xpose.msra.mxu0 0.0
        %429 = vmatprep.subr.mxu0 0.0
        %430 = vmatpush1.xpose.msra.mxu0 0.0
        %431 = vmatprep.subr.mxu0 0.0
        %432 = vmatpush1.xpose.msra.mxu0 0.0
        %433 = vmatprep.subr.mxu0 0.0
        %434 = vmatpush1.xpose.msra.mxu0 0.0
        %435 = vmatprep.subr.mxu0 0.0
        %436 = vmatpush1.xpose.msra.mxu0 0.0
        %437 = vmatprep.subr.mxu0 0.0
        %438 = vmatpush1.xpose.msra.mxu0 0.0
        %439 = vmatprep.subr.mxu0 0.0
        %440 = vmatpush1.xpose.msra.mxu0 0.0
        %441 = vmatprep.subr.mxu0 0.0
        %442 = vmatpush1.xpose.msra.mxu0 0.0
        %443 = vmatprep.subr.mxu0 0.0
        %444 = vmatpush1.xpose.msra.mxu0 0.0
        %445 = vmatprep.subr.mxu0 0.0
        %446 = vmatpush1.xpose.msra.mxu0 0.0
        %447 = vmatprep.subr.mxu0 0.0
        %448 = vmatpush1.xpose.msra.mxu0 0.0
        %449 = vmatprep.subr.mxu0 0.0
        %450 = vmatpush1.xpose.msra.mxu0 0.0
        %451 = vmatprep.subr.mxu0 0.0
        %452 = vmatpush1.xpose.msra.mxu0 0.0
        %453 = vmatprep.subr.mxu0 0.0
        %454 = vmatpush1.xpose.msra.mxu0 0.0
        %455 = vmatprep.subr.mxu0 0.0
        %456 = vmatpush1.xpose.msra.mxu0 0.0
        %457 = vmatprep.subr.mxu0 0.0
        %458 = vmatpush1.xpose.msra.mxu0 0.0
        %459 = vmatprep.subr.mxu0 0.0
        %460 = vmatpush1.xpose.msra.mxu0 0.0
        %461 = vmatprep.subr.mxu0 0.0
        %462 = vmatpush1.xpose.msra.mxu0 0.0
        %463 = vmatprep.subr.mxu0 0.0
        %464 = vmatpush1.xpose.msra.mxu0 0.0
        %465 = vmatprep.subr.mxu0 0.0
        %466 = vmatpush1.xpose.msra.mxu0 0.0
        %467 = vmatprep.subr.mxu0 0.0
        %468 = vmatpush1.xpose.msra.mxu0 0.0
        %469 = vmatprep.subr.mxu0 0.0
        %470 = vmatpush1.xpose.msra.mxu0 0.0
        %471 = vmatprep.subr.mxu0 0.0
        %472 = vmatpush1.xpose.msra.mxu0 0.0
        %473 = vmatprep.subr.mxu0 0.0
        %474 = vmatpush1.xpose.msra.mxu0 0.0
        %475 = vmatprep.subr.mxu0 0.0
        %476 = vmatpush1.xpose.msra.mxu0 0.0
        %477 = vmatprep.subr.mxu0 0.0
        %478 = vmatpush1.xpose.msra.mxu0 0.0
        %479 = vmatprep.subr.mxu0 0.0
        %480 = vmatpush1.xpose.msra.mxu0 0.0
        %481 = vmatprep.subr.mxu0 0.0
        %482 = vmatpush1.xpose.msra.mxu0 0.0
        %483 = vmatprep.subr.mxu0 0.0
        %484 = vmatpush1.xpose.msra.mxu0 0.0
        %485 = vmatprep.subr.mxu0 0.0
        %486 = vmatpush1.xpose.msra.mxu0 0.0
        %487 = vmatprep.mubr.f32.mxu0 0.0
        %488 = vmatmul.mubr.f32.gmra.mrb[0].mxu0 %v418
        %v489 = vpop.f32.mrb[0].mxu0
        %v490 = vadd.f32 0.0, %v489
        %v491 = vpop.f32.mrb[0].mxu0
        %492 = vdwg.mxu0
        %vm493 = vcmp.ge.f32.partialorder %v490, 0.0
        %v494 = vmul.f32 %v490, 0.2
        %v495 = vsel %vm493, %v490, %v494
        %vm496 = vcmp.lt.s32.totalorder %v330, 1
        %v497 = vsel %vm496, %v330, 1
        %vm498 = vcmp.eq.s32.totalorder %v497, 1
        %v499 = vsel %vm498, %v495, -9e+15
        %vm500 = vcmask 64512
        %v501 = vsel %vm500, %v499, -inf
        %502 = vmax.xlane.f32.xlu0 %v501
        %v503 = vpop.xlane.xlu0 %502
        %v504 = vsub.f32 %v499, %v503
        %v505 = vmul.f32 %v504, 1.442695
        %v506 = vpow.pop %v505
        %v507 = vsel %vm500, %v506, 0.0
        %508 = vadd.xlane.f32.xlu0 %v507
        %v509 = vpop.xlane.xlu0 %508
        %v510 = vrcp.pop %v509
        %v511 = vmul.f32 %v506, %v510
        %v513 = vsel %vm500, %v511, 0
        %515 = vmatprep.subr.mxu0 0.0
        %516 = vmatpush1.msra.mxu0 %v407
        %517 = vmatprep.subr.mxu0 0.0
        %518 = vmatpush1.msra.mxu0 0.0
        %519 = vmatprep.subr.mxu0 0.0
        %520 = vmatpush1.msra.mxu0 0.0
        %521 = vmatprep.subr.mxu0 0.0
        %522 = vmatpush1.msra.mxu0 0.0
        %523 = vmatprep.subr.mxu0 0.0
        %524 = vmatpush1.msra.mxu0 0.0
        %525 = vmatprep.subr.mxu0 0.0
        %526 = vmatpush1.msra.mxu0 0.0
        %527 = vmatprep.subr.mxu0 0.0
        %528 = vmatpush1.msra.mxu0 0.0
        %529 = vmatprep.subr.mxu0 0.0
        %530 = vmatpush1.msra.mxu0 0.0
        %531 = vmatprep.subr.mxu0 0.0
        %532 = vmatpush1.msra.mxu0 0.0
        %533 = vmatprep.subr.mxu0 0.0
        %534 = vmatpush1.msra.mxu0 0.0
        %535 = vmatprep.subr.mxu0 0.0
        %536 = vmatpush1.msra.mxu0 0.0
        %537 = vmatprep.subr.mxu0 0.0
        %538 = vmatpush1.msra.mxu0 0.0
        %539 = vmatprep.subr.mxu0 0.0
        %540 = vmatpush1.msra.mxu0 0.0
        %541 = vmatprep.subr.mxu0 0.0
        %542 = vmatpush1.msra.mxu0 0.0
        %543 = vmatprep.subr.mxu0 0.0
        %544 = vmatpush1.msra.mxu0 0.0
        %545 = vmatprep.subr.mxu0 0.0
        %546 = vmatpush1.msra.mxu0 0.0
        %547 = vmatprep.subr.mxu0 0.0
        %548 = vmatpush1.msra.mxu0 0.0
        %549 = vmatprep.subr.mxu0 0.0
        %550 = vmatpush1.msra.mxu0 0.0
        %551 = vmatprep.subr.mxu0 0.0
        %552 = vmatpush1.msra.mxu0 0.0
        %553 = vmatprep.subr.mxu0 0.0
        %554 = vmatpush1.msra.mxu0 0.0
        %555 = vmatprep.subr.mxu0 0.0
        %556 = vmatpush1.msra.mxu0 0.0
        %557 = vmatprep.subr.mxu0 0.0
        %558 = vmatpush1.msra.mxu0 0.0
        %559 = vmatprep.subr.mxu0 0.0
        %560 = vmatpush1.msra.mxu0 0.0
        %561 = vmatprep.subr.mxu0 0.0
        %562 = vmatpush1.msra.mxu0 0.0
        %563 = vmatprep.subr.mxu0 0.0
        %564 = vmatpush1.msra.mxu0 0.0
        %565 = vmatprep.subr.mxu0 0.0
        %566 = vmatpush1.msra.mxu0 0.0
        %567 = vmatprep.subr.mxu0 0.0
        %568 = vmatpush1.msra.mxu0 0.0
        %569 = vmatprep.subr.mxu0 0.0
        %570 = vmatpush1.msra.mxu0 0.0
        %571 = vmatprep.subr.mxu0 0.0
        %572 = vmatpush1.msra.mxu0 0.0
        %573 = vmatprep.subr.mxu0 0.0
        %574 = vmatpush1.msra.mxu0 0.0
        %575 = vmatprep.subr.mxu0 0.0
        %576 = vmatpush1.msra.mxu0 0.0
        %577 = vmatprep.subr.mxu0 0.0
        %578 = vmatpush1.msra.mxu0 0.0
        %579 = vmatprep.mubr.f32.mxu0 0.0
        %580 = vmatmul.mubr.f32.gmra.mrb[0].mxu0 %v513
        %v581 = vpop.f32.mrb[0].mxu0
        %v582 = vadd.f32 0.0, %v581
        %v583 = vpop.f32.mrb[0].mxu0
        %584 = vdwg.mxu0
        %585 = vst.msk [vmem:[%s321] sm:$0xff] %vm336, %v582
        %586 = vst.msk [vmem:[%s328] sm:$0xff] %vm500, %v495
        %s587 = sand.u32 %s153, 1
        %s588 = scalar_lea.sflag [#allocation4], %s587
        %s589 = sand.u32 %s153, 1
        %s590 = smul.addr %s589, 8
        %s591 = scalar_lea.vmem [#allocation8], %s590
        %s592 = sand.u32 %s179, 1
        %s593 = scalar_lea.sflag [#allocation10], %s592
        %s594 = sand.u32 %s179, 1
        %s595 = smul.addr %s594, 8
        %s596 = scalar_lea.vmem [#allocation9], %s595
        // Predicated region
        $region53: #{tpu_custom_call.1} parent=39 // pred_check
          %p597 = pneg %p163
        $region54: #{tpu_custom_call.1} parent=39 // pred_check_branch
          %599 = sbr.rel (%p597) target = $region56
        $region55: #{tpu_custom_call.1} parent=39 // pred_region
          %s601 = ssub.s32 128, 128
          %602 = vsyncadd %s588, %s601
          %s603 = smul.addr %s30, 128
          %s604 = scalar_lea.hbm %s5, %s603
          %s606 = sshll.u32 %s591, 4
          %s607 = int_to_ptr.vmem [resolvable:$true] %s606
          %609 = dma.vmem_to_hbm [thread:$0]  %s607, 128, %s604, %s588
        $region56: #{tpu_custom_call.1} parent=39 // pred_fallthru
          _
        // Predicated region
        $region57: #{tpu_custom_call.1} parent=39 // pred_check
          %p610 = pneg %p189
        $region58: #{tpu_custom_call.1} parent=39 // pred_check_branch
          %612 = sbr.rel (%p610) target = $region60
        $region59: #{tpu_custom_call.1} parent=39 // pred_region
          %s614 = ssub.s32 128, 128
          %615 = vsyncadd %s593, %s614
          %s616 = smul.addr %s30, 128
          %s617 = scalar_lea.hbm %s6, %s616
          %s619 = sshll.u32 %s596, 4
          %s620 = int_to_ptr.vmem [resolvable:$true] %s619
          %622 = dma.vmem_to_hbm [thread:$0]  %s620, 128, %s617, %s593
        $region60: #{tpu_custom_call.1} parent=39 // pred_fallthru
          _
      $region40: #{tpu_custom_call.1} parent=5 // pred_fallthru
        _
      %p623 = scmp.le.s32.totalorder 2, %s25
      // Predicated region
      $region61: #{tpu_custom_call.1} parent=5 // pred_check
        %p624 = pneg %p623
      $region62: #{tpu_custom_call.1} parent=5 // pred_check_branch
        %626 = sbr.rel (%p624) target = $region64
      $region63: #{tpu_custom_call.1} parent=5 // pred_region
        %s627 = ssub.s32 %s25, 2
        // Predicated region
        $region65: #{tpu_custom_call.1} parent=63 // pred_check
          %p628 = pneg %p169
        $region66: #{tpu_custom_call.1} parent=63 // pred_check_branch
          %630 = sbr.rel (%p628) target = $region68
        $region67: #{tpu_custom_call.1} parent=63 // pred_region
          %s631 = sand.u32 %s154, 1
          %s632 = scalar_lea.sflag [#allocation4], %s631
          %s633 = sand.u32 %s154, 1
          %s634 = smul.addr %s633, 8
          %s635 = scalar_lea.vmem [#allocation8], %s634
          %636 = dma.done %s632, 128
        $region68: #{tpu_custom_call.1} parent=63 // pred_fallthru
          _
        // Predicated region
        $region69: #{tpu_custom_call.1} parent=63 // pred_check
          %p637 = pneg %p195
        $region70: #{tpu_custom_call.1} parent=63 // pred_check_branch
          %639 = sbr.rel (%p637) target = $region72
        $region71: #{tpu_custom_call.1} parent=63 // pred_region
          %s640 = sand.u32 %s180, 1
          %s641 = scalar_lea.sflag [#allocation10], %s640
          %s642 = sand.u32 %s180, 1
          %s643 = smul.addr %s642, 8
          %s644 = scalar_lea.vmem [#allocation9], %s643
          %645 = dma.done %s641, 128
        $region72: #{tpu_custom_call.1} parent=63 // pred_fallthru
          _
      $region64: #{tpu_custom_call.1} parent=5 // pred_fallthru
        _
    $region6: #{tpu_custom_call.1} parent=1 // loop_footer
      %s29 = sadd.s32 1, %s25
    $region7: #{tpu_custom_call.1} parent=1 // loop_footer_branch
      %24 = sbr.rel target = $region3
    $region8: #{tpu_custom_call.1} parent=1 // loop_exit
      _
    %646 = vsyncpa [#allocation3], 1
    %s647 = scalar_lea.sflag [#allocation3], 1
    %648 = vsyncpa %s647, 1
    %649 = vsyncpa [#allocation6], 1
    %s650 = scalar_lea.sflag [#allocation6], 1
    %651 = vsyncpa %s650, 1
    %652 = vsyncpa [#allocation4], 1
    %s653 = scalar_lea.sflag [#allocation4], 1
    %654 = vsyncpa %s653, 1
    %655 = vsyncpa [#allocation10], 1
    %s656 = scalar_lea.sflag [#allocation10], 1
    %657 = vsyncpa %s656, 1

</llo_original>
